<compile_context>
chip_gen: v5e
topology: v5e:2x2
jax: 0.10.0
libtpu: 0.0.40
codegen_flags: <defaults>
</compile_context>

<pallas_src>
import functools
import math

import jax
import jax.numpy as jnp
from jax.experimental import pallas as pl
from jax.experimental.pallas import tpu as pltpu


# ---------------------------------------------------------------------------
# Kernel
# ---------------------------------------------------------------------------
def _rmsnorm_kernel(x_ref, w_ref, o_ref, *, eps):
    # torch semantics:
    #   x32 = x.to(float32); var = mean(x32**2, -1, keepdim=True)
    #   normed = (x32 * rsqrt(var + eps)).to(input_dtype)
    #   out = weight * normed            (promoted dtype), then cast to o_ref
    x32 = x_ref[...].astype(jnp.float32)
    var = jnp.mean(x32 * x32, axis=-1, keepdims=True)
    inv = jax.lax.rsqrt(var + eps)
    normed = (x32 * inv).astype(x_ref.dtype)          # torch-parity down-cast

    compute_dtype = jnp.promote_types(w_ref.dtype, x_ref.dtype)
    out = w_ref[...].astype(compute_dtype) * normed.astype(compute_dtype)
    o_ref[...] = out.astype(o_ref.dtype)


# ---------------------------------------------------------------------------
# Tiling helpers
# ---------------------------------------------------------------------------
def _sublane_rows(dtype) -> int:
    """Rows per packed vreg for this dtype (sublane packing)."""
    itemsize = jnp.dtype(dtype).itemsize
    return {4: 8, 2: 16, 1: 32}.get(itemsize, 8)


def _tpu_vmem_capacity_bytes() -> int:
    """Physical VMEM per TensorCore; fall back to 128 MiB (v5e/v6e) if unknown."""
    try:
        return int(pltpu.get_tpu_info().vmem_capacity_bytes)
    except Exception:
        return 128 << 20


def _pick_row_tile(rows, hidden, x_dtype, out_dtype, vmem_budget_bytes, is_v7x,
                   max_tile=1024):
    """Largest sublane-aligned row tile fitting the VMEM budget.

    Budget math counts the double-buffered input and output DMA blocks plus
    ~8 bytes/elem of single-buffered fp32 intermediates (x32 upcast + product)
    so sub-32-bit inputs don't overshoot the scoped VMEM limit.
    """
    sub = _sublane_rows(x_dtype)
    in_b = jnp.dtype(x_dtype).itemsize
    out_b = jnp.dtype(out_dtype).itemsize
    bytes_per_row = hidden * (2 * (in_b + out_b) + 8)
    tr = (vmem_budget_bytes // bytes_per_row) // sub * sub
    tr = max(sub, min(tr, max_tile))

    # v7x has 2 TCs/chip: make sure both get (roughly equal) work when
    # rows allow it. One extra grid step costs only ~0.35 us.
    if is_v7x and rows >= 2 * sub:
        half = max(sub, pl.cdiv(pl.cdiv(rows, 2), sub) * sub)
        tr = min(tr, half)

    if rows <= tr:
        # Single block spanning the full row extent: always layout-legal
        # (block equals full array dim), no edge masking needed.
        return rows
    return tr


# ---------------------------------------------------------------------------
# Wrapper
# ---------------------------------------------------------------------------
def llama_rmsnorm(x, weight, eps=1e-6, *, row_tile=None, out_dtype=None):
    """x: (..., H); weight: (H,). Returns x.shape.

    out_dtype defaults to x.dtype (minimal HBM writeback). Pass
    out_dtype=jnp.promote_types(weight.dtype, x.dtype) for exact parity with
    torch's output dtype (e.g. fp32 output for bf16 activations + fp32 gamma).
    """
    orig_shape = x.shape
    hidden = orig_shape[-1]
    rows = math.prod(orig_shape[:-1]) if len(orig_shape) > 1 else 1

    if out_dtype is None:
        out_dtype = x.dtype   # NOTE: deviates from torch promotion on purpose.

    x2d = x.reshape(rows, hidden)
    w2d = weight.reshape(1, hidden)

    # Generation-aware VMEM budgeting.
    vmem_cap = _tpu_vmem_capacity_bytes()
    is_v7x = vmem_cap <= (64 << 20)
    if is_v7x:
        budget, limit = 16 << 20, 32 << 20      # 64 MiB physical VMEM
    else:
        budget, limit = 48 << 20, 80 << 20      # 128 MiB physical (v5e/v6e)

    tr = row_tile if row_tile is not None else _pick_row_tile(
        rows, hidden, x.dtype, out_dtype, budget, is_v7x)

    # Ragged row counts: no host-side pad/slice. The last (partial) block is
    # edge-masked by Pallas: OOB rows read garbage (harmless, per-row math)
    # and their stores are discarded.
    num_tiles = pl.cdiv(rows, tr)

    out2d = pl.pallas_call(
        functools.partial(_rmsnorm_kernel, eps=eps),
        out_shape=jax.ShapeDtypeStruct((rows, hidden), out_dtype),
        grid_spec=pltpu.PrefetchScalarGridSpec(
            num_scalar_prefetch=0,
            grid=(num_tiles,),
            in_specs=[
                pl.BlockSpec((tr, hidden), lambda i: (i, 0)),   # x row-tile
                pl.BlockSpec((1, hidden), lambda i: (0, 0)),    # weight (bcast)
            ],
            out_specs=pl.BlockSpec((tr, hidden), lambda i: (i, 0)),
        ),
        compiler_params=pltpu.CompilerParams(
            dimension_semantics=("parallel",),
            vmem_limit_bytes=limit,
        ),
    )(x2d, w2d)

    return out2d.reshape(orig_shape)


# ---------------------------------------------------------------------------
# Pure-JAX reference (torch-faithful)
# ---------------------------------------------------------------------------
def _reference(x, weight, eps=1e-6):
    x32 = x.astype(jnp.float32)
    var = jnp.mean(x32 * x32, axis=-1, keepdims=True)
    normed = (x32 * jax.lax.rsqrt(var + eps)).astype(x.dtype)
    out_dtype = jnp.promote_types(weight.dtype, x.dtype)
    return weight.astype(out_dtype) * normed.astype(out_dtype)


if __name__ == "__main__":
    key = jax.random.PRNGKey(0)

    # --- Canonical small test matching the module: (batch=2, seq=8, hidden=32)
    batch, seq, hidden = 2, 8, 32
    x = jax.random.normal(key, (batch, seq, hidden), dtype=jnp.float32)
    weight = jnp.ones((hidden,), dtype=jnp.float32)   # nn.Parameter(torch.ones)

    out = jax.block_until_ready(llama_rmsnorm(x, weight, eps=1e-6))
    ref = _reference(x, weight, eps=1e-6)
    assert out.shape == x.shape and out.dtype == ref.dtype
    assert jnp.allclose(out, ref, atol=1e-5, rtol=1e-5), "fp32 mismatch vs reference"

    # --- Ragged row count + bf16 input, torch-parity output dtype (fp32)
    x_bf = jax.random.normal(jax.random.PRNGKey(1), (3, 5, 256),
                             dtype=jnp.float32).astype(jnp.bfloat16)
    w_bf = (1.0 + 0.01 * jax.random.normal(jax.random.PRNGKey(2), (256,))
            ).astype(jnp.float32)
    ref_bf = _reference(x_bf, w_bf, eps=1e-6)
    out_pt = jax.block_until_ready(
        llama_rmsnorm(x_bf, w_bf, eps=1e-6,
                      out_dtype=jnp.promote_types(w_bf.dtype, x_bf.dtype)))
    assert out_pt.shape == x_bf.shape and out_pt.dtype == ref_bf.dtype
    assert jnp.allclose(out_pt, ref_bf, atol=2e-2, rtol=2e-2), "bf16 mismatch (parity)"

    # --- Default fast path: output stays in x.dtype (bf16), halving writeback
    out_fast = jax.block_until_ready(llama_rmsnorm(x_bf, w_bf, eps=1e-6))
    assert out_fast.dtype == x_bf.dtype
    assert jnp.allclose(out_fast.astype(jnp.float32), ref_bf.astype(jnp.float32),
                        atol=3e-2, rtol=3e-2), "bf16 mismatch (fast path)"

    # --- Force a ragged multi-tile grid (edge-masked last block, no pad/slice)
    x_rg = jax.random.normal(jax.random.PRNGKey(3), (4, 5, 128), dtype=jnp.float32)
    w_rg = (1.0 + 0.01 * jax.random.normal(jax.random.PRNGKey(4), (128,))
            ).astype(jnp.float32)
    out_rg = jax.block_until_ready(llama_rmsnorm(x_rg, w_rg, eps=1e-6, row_tile=8))
    ref_rg = _reference(x_rg, w_rg, eps=1e-6)
    assert jnp.allclose(out_rg, ref_rg, atol=1e-5, rtol=1e-5), "ragged-grid mismatch"

    print("KERNEL_OK")
</pallas_src>

<mosaic_0001>
module attributes {stable_mosaic.version = 11 : i64} {
  func.func @_rmsnorm_kernel(%arg0: i32, %arg1: memref<16x32xf32, #tpu.memory_space<vmem>>, %arg2: memref<1x32xf32, #tpu.memory_space<vmem>>, %arg3: memref<16x32xf32, #tpu.memory_space<vmem>>) attributes {dimension_semantics = [#tpu.dimension_semantics<parallel>], iteration_bounds = array<i64: 1>, scalar_prefetch = 0 : i64, scratch_operands = 0 : i64, tpu.core_type = #tpu.core_type<tc>, window_params = [{transform_indices = @transform_0, window_bounds = array<i64: 16, 32>}, {pipeline_mode = #tpu.pipeline_mode<synchronous>, transform_indices = @transform_1, window_bounds = array<i64: 1, 32>}, {transform_indices = @transform_2, window_bounds = array<i64: 16, 32>}]} {
    %c0 = arith.constant 0 : index
    %c0_0 = arith.constant 0 : index
    %0 = vector.load %arg1[%c0, %c0_0] : memref<16x32xf32, #tpu.memory_space<vmem>>, vector<16x32xf32>
    %1 = arith.mulf %0, %0 : vector<16x32xf32>
    %cst = arith.constant dense<0.000000e+00> : vector<16xf32>
    %2 = vector.multi_reduction <add>, %1, %cst [1] : vector<16x32xf32> to vector<16xf32>
    %3 = vector.shape_cast %2 : vector<16xf32> to vector<16x1xf32>
    %cst_1 = arith.constant 3.200000e+01 : f32
    %4 = vector.broadcast %cst_1 : f32 to vector<16x1xf32>
    %5 = arith.divf %3, %4 : vector<16x1xf32>
    %cst_2 = arith.constant 9.99999997E-7 : f32
    %6 = vector.broadcast %cst_2 : f32 to vector<16x1xf32>
    %7 = arith.addf %5, %6 : vector<16x1xf32>
    %8 = math.rsqrt %7 : vector<16x1xf32>
    %9 = vector.broadcast %8 : vector<16x1xf32> to vector<16x32xf32>
    %10 = arith.mulf %0, %9 : vector<16x32xf32>
    %c0_3 = arith.constant 0 : index
    %c0_4 = arith.constant 0 : index
    %11 = vector.load %arg2[%c0_3, %c0_4] : memref<1x32xf32, #tpu.memory_space<vmem>>, vector<1x32xf32>
    %12 = vector.broadcast %11 : vector<1x32xf32> to vector<16x32xf32>
    %13 = arith.mulf %12, %10 : vector<16x32xf32>
    %c0_5 = arith.constant 0 : index
    %c0_6 = arith.constant 0 : index
    %14 = vector.load %arg3[%c0_5, %c0_6] : memref<16x32xf32, #tpu.memory_space<vmem>>, vector<16x32xf32>
    tpu.vector_store %arg3[%c0_5, %c0_6], %13 {strides = array<i32>} : memref<16x32xf32, #tpu.memory_space<vmem>>, vector<16x32xf32>,
    return
  }
  func.func @transform_0(%arg0: i32) -> (i32, i32) {
    %c0_i32 = arith.constant 0 : i32
    %c0_i32_0 = arith.constant 0 : i32
    return %arg0, %c0_i32 : i32, i32
  }
  func.func @transform_1(%arg0: i32) -> (i32, i32) {
    %c0_i32 = arith.constant 0 : i32
    %c0_i32_0 = arith.constant 0 : i32
    %c0_i32_1 = arith.constant 0 : i32
    return %c0_i32, %c0_i32_0 : i32, i32
  }
  func.func @transform_2(%arg0: i32) -> (i32, i32) {
    %c0_i32 = arith.constant 0 : i32
    %c0_i32_0 = arith.constant 0 : i32
    return %arg0, %c0_i32 : i32, i32
  }
}

</mosaic_0001>

<llo_original>
// kernel: tpu_custom_call.1
$region0: #{tpu_custom_call.1}
  #allocation0 [shape = 'u32[]', space=smem, size = 0x4, offset = 0x4, fixed_abs, tag = 'smem constant byte address 0x4 - core index']
  #allocation1 [shape = 'u32[72,128]{1,0:T(1,128)}', space=vmem, size = 0x9000, scoped, tag = 'internal scratch']
  %s0 = inlined_call_operand.hbm [shape: f32[16,32], index: 0, kind: input, shape index: {}]
  %s1 = inlined_call_operand.hbm [shape: f32[1,32], index: 1, kind: input, shape index: {}]
  %s2 = inlined_call_operand.hbm [shape: f32[16,32], index: 2, kind: output, shape index: {}]
  %s3 = sld [smem:[#allocation0]]
  $region26: #{tpu_custom_call.1} parent=0
    _
  %s5 = ssub.s32 1, %s3
  %s6 = scalar_select 0, %s5, %s3
  $region1: #{tpu_custom_call.1} parent=0
    #allocation2 [shape = 'u8[8192]{0}', space=vmem, size = 0x2000, scoped, tag = 'input window, operand 0, single buffered']
    #allocation3 [shape = 's32[1]{0}', space=sflag, size = 0x4, scoped, tag = 'scoped memory for tpu_custom_call.1']
    #allocation4 [shape = 's32[1]{0}', space=sflag, size = 0x4, scoped, tag = 'scoped memory for tpu_custom_call.1']
    #allocation5 [shape = 'u8[512]{0}', space=vmem, size = 0x400, scoped, tag = 'input window, operand 1, single buffered']
    #allocation6 [shape = 's32[1]{0}', space=sflag, size = 0x4, scoped, tag = 'scoped memory for tpu_custom_call.1']
    #allocation7 [shape = 'u8[8192]{0}', space=vmem, size = 0x2000, scoped, tag = 'output window, operand 0, single buffered']
    %7 = vsyncpa [#allocation3], 0
    %8 = vsyncpa [#allocation6], 0
    %9 = vsyncpa [#allocation4], 0
    // Predicated region
    $region2: #{tpu_custom_call.1} parent=1 // pred_check
      _
    $region3: #{tpu_custom_call.1} parent=1 // pred_check_branch
      %11 = sbr.rel (0) target = $region5
    $region4: #{tpu_custom_call.1} parent=1 // pred_region
      %13 = vsyncadd [#allocation3], 0
      %s14 = sshll.u32 %s0, 4
      %s15 = int_to_ptr.hbm [resolvable:$true] %s14
      %s16 = sshll.u32 [#allocation2], 4
      %s17 = int_to_ptr.vmem [resolvable:$true] %s16
      %22 = dma.hbm_to_vmem [thread:$0]  %s15, 256, %s17, [#allocation3], 128, 128, 8
    $region5: #{tpu_custom_call.1} parent=1 // pred_fallthru
      _
    // Predicated region
    $region6: #{tpu_custom_call.1} parent=1 // pred_check
      _
    $region7: #{tpu_custom_call.1} parent=1 // pred_check_branch
      %24 = sbr.rel (0) target = $region9
    $region8: #{tpu_custom_call.1} parent=1 // pred_region
      %26 = vsyncadd [#allocation6], 0
      %s28 = sshll.u32 %s1, 4
      %s29 = int_to_ptr.hbm [resolvable:$true] %s28
      %s30 = sshll.u32 [#allocation5], 4
      %s31 = int_to_ptr.vmem [resolvable:$true] %s30
      %33 = dma.hbm_to_vmem [thread:$0]  %s29, 16, %s31, [#allocation6]
    $region9: #{tpu_custom_call.1} parent=1 // pred_fallthru
      _
    // Predicated region
    $region10: #{tpu_custom_call.1} parent=1 // pred_check
      _
    $region11: #{tpu_custom_call.1} parent=1 // pred_check_branch
      %35 = sbr.rel (0) target = $region13
    $region12: #{tpu_custom_call.1} parent=1 // pred_region
      %37 = dma.done [#allocation3], 256
    $region13: #{tpu_custom_call.1} parent=1 // pred_fallthru
      _
    // Predicated region
    $region14: #{tpu_custom_call.1} parent=1 // pred_check
      _
    $region15: #{tpu_custom_call.1} parent=1 // pred_check_branch
      %39 = sbr.rel (0) target = $region17
    $region16: #{tpu_custom_call.1} parent=1 // pred_region
      %41 = dma.done [#allocation6], 16
    $region17: #{tpu_custom_call.1} parent=1 // pred_fallthru
      _
    %v42 = vld [vmem:[#allocation2] sm:$0xff]
    %v43 = vld [vmem:[#allocation2 + $0x8] sm:$0xff]
    %v44 = vmul.f32 %v42, %v42
    %v45 = vmul.f32 %v43, %v43
    %vm46 = vcmask 261120
    %v47 = vsel %vm46, %v44, 0.0
    %48 = vadd.xlane.f32.xlu0 %v47
    %v49 = vpop.xlane.xlu0 %48
    %v50 = vsel %vm46, %v45, 0.0
    %51 = vadd.xlane.f32.xlu0 %v50
    %v52 = vpop.xlane.xlu0 %51
    %v53 = vrcp.pop 32.0
    %v54 = vmul.f32 32.0, %v53
    %v55 = vsub.f32 1.0, %v54
    %v56 = vmul.f32 %v53, %v55
    %v57 = vadd.f32 %v53, %v56
    %vm58 = vweird.f32 %v53
    %v59 = vsel %vm58, %v53, %v57
    %v60 = vmul.f32 %v49, %v59
    %v61 = vmul.f32 %v52, %v59
    %v62 = vadd.f32 %v60, 1e-06
    %v63 = vadd.f32 %v61, 1e-06
    %v64 = vrsqrt.pop %v62
    %v65 = vmul.f32 %v64, %v62
    %v66 = vmul.f32 %v65, %v64
    %v67 = vmul.f32 0.5, %v66
    %v68 = vsub.f32 1.5, %v67
    %v69 = vmul.f32 %v64, %v68
    %vm70 = vweird.f32 %v62
    %vm71 = vweird.f32 %v64
    %vm72 = vmor %vm70, %vm71
    %v73 = vsel %vm72, %v64, %v69
    %v74 = vrsqrt.pop %v63
    %v75 = vmul.f32 %v74, %v63
    %v76 = vmul.f32 %v75, %v74
    %v77 = vmul.f32 0.5, %v76
    %v78 = vsub.f32 1.5, %v77
    %v79 = vmul.f32 %v74, %v78
    %vm80 = vweird.f32 %v63
    %vm81 = vweird.f32 %v74
    %vm82 = vmor %vm80, %vm81
    %v83 = vsel %vm82, %v74, %v79
    %v84 = vmul.f32 %v42, %v73
    %v85 = vmul.f32 %v43, %v83
    %v86 = vld [vmem:[#allocation5] sm:$0x1]
    %v88 = vperm.slane %v86, 0
    %v90 = vmul.f32 %v88, %v84
    %v91 = vmul.f32 %v88, %v85
    %92 = vst.msk [vmem:[#allocation7] sm:$0xff] %vm46, %v90
    %93 = vst.msk [vmem:[#allocation7 + $0x8] sm:$0xff] %vm46, %v91
    // Predicated region
    $region18: #{tpu_custom_call.1} parent=1 // pred_check
      _
    $region19: #{tpu_custom_call.1} parent=1 // pred_check_branch
      %95 = sbr.rel (0) target = $region21
    $region20: #{tpu_custom_call.1} parent=1 // pred_region
      %97 = vsyncadd [#allocation4], 0
      %s98 = sshll.u32 [#allocation7], 4
      %s99 = int_to_ptr.vmem [resolvable:$true] %s98
      %s100 = sshll.u32 %s2, 4
      %s101 = int_to_ptr.hbm [resolvable:$true] %s100
      %106 = dma.vmem_to_hbm [thread:$0]  %s99, 256, %s101, [#allocation4], 128, 128, 8
    $region21: #{tpu_custom_call.1} parent=1 // pred_fallthru
      _
    // Predicated region
    $region22: #{tpu_custom_call.1} parent=1 // pred_check
      _
    $region23: #{tpu_custom_call.1} parent=1 // pred_check_branch
      %108 = sbr.rel (0) target = $region25
    $region24: #{tpu_custom_call.1} parent=1 // pred_region
      %110 = dma.done [#allocation4], 256
    $region25: #{tpu_custom_call.1} parent=1 // pred_fallthru
      _
    %111 = vsyncpa [#allocation3], 1
    %112 = vsyncpa [#allocation6], 1
    %113 = vsyncpa [#allocation4], 1

</llo_original>
